<compile_context>
chip_gen: v6e
topology: v6e:2x2x1
jax: 0.10.0
libtpu: 0.0.40
codegen_flags: <defaults>
</compile_context>

<pallas_src>
import math

import jax
import jax.numpy as jnp
from jax.experimental import pallas as pl
from jax.experimental.pallas import tpu as pltpu


def make_position_encode_2d(dim: int, width: int, height: int) -> jnp.ndarray:
    """Builds the fixed positional-encoding buffer `pos` of shape
    (1, dim, height, width), matching PositionEncode2D.__init__ in PyTorch."""
    assert dim % 4 == 0
    dim_half = dim // 2                     # "dim" after the in-__init__ halving
    n = dim_half // 2                       # number of frequencies
    d = jnp.exp(jnp.arange(0.0, dim_half, 2.0) * -(math.log(10000.0) / dim_half))  # (n,)

    position_w = jnp.arange(0.0, width)[:, None]    # (W, 1)
    position_h = jnp.arange(0.0, height)[:, None]   # (H, 1)

    # (n, W) -> broadcast to (n, H, W)
    sin_w = jnp.transpose(jnp.sin(position_w * d))[:, None, :]          # (n, 1, W)
    cos_w = jnp.transpose(jnp.cos(position_w * d))[:, None, :]          # (n, 1, W)
    sin_w = jnp.broadcast_to(sin_w, (n, height, width))
    cos_w = jnp.broadcast_to(cos_w, (n, height, width))

    # (n, H) -> broadcast to (n, H, W)
    sin_h = jnp.transpose(jnp.sin(position_h * d))[:, :, None]          # (n, H, 1)
    cos_h = jnp.transpose(jnp.cos(position_h * d))[:, :, None]          # (n, H, 1)
    sin_h = jnp.broadcast_to(sin_h, (n, height, width))
    cos_h = jnp.broadcast_to(cos_h, (n, height, width))

    # Interleave sin/cos along the channel axis.
    first_half = jnp.stack([sin_w, cos_w], axis=1).reshape(dim_half, height, width)
    second_half = jnp.stack([sin_h, cos_h], axis=1).reshape(dim_half, height, width)

    pos = jnp.concatenate([first_half, second_half], axis=0)            # (dim, H, W)
    return pos[None].astype(jnp.float32)                                # (1, dim, H, W)


def prepare_pos(pos: jnp.ndarray, H: int, W: int) -> jnp.ndarray:
    """Hoisted out of the forward path (done once): slice the stored buffer to
    the actual (H, W) and flatten to a lane-dense (1, C*H*W) float32 layout.
    pos stays float32 so reduced-precision activations promote exactly like
    the PyTorch module (which keeps the buffer in float32)."""
    _, C, Hp, Wp = pos.shape
    assert Hp >= H and Wp >= W
    p = pos[:, :, :H, :W] if (Hp != H or Wp != W) else pos
    return p.reshape(1, C * H * W).astype(jnp.float32)


def _device_tuning():
    """(target block bytes, scoped VMEM limit) per TPU generation.
    Defaults are conservative enough for v7x's 64 MiB physical VMEM; never
    exceeds the physical capacity of any listed generation."""
    kind = ""
    try:
        kind = jax.devices()[0].device_kind.lower()
    except Exception:
        pass
    if "v6" in kind:                                   # v6e: 128 MiB VMEM, ~1.4 TB/s
        return 6 * 1024 * 1024, 64 * 1024 * 1024
    if "v5 lite" in kind or "v5lite" in kind or "v5e" in kind:
        return 4 * 1024 * 1024, 32 * 1024 * 1024       # v5e: keep the 32 MiB limit
    # v7x (64 MiB physical VMEM) and unknown chips: conservative budget.
    return 4 * 1024 * 1024, 48 * 1024 * 1024


def _choose_tiles(B: int, N: int, itemsize: int, target_bytes: int):
    """Pick (tb, tl) block dims for the flattened (B, N) view.

    TPU layout constraints: tl is a multiple of 128 or == N (dense, unmasked
    stores); tb is a multiple of the dtype's sublane minimum or == B.  Blocks
    are sized toward `target_bytes` to amortize the ~0.35 us per-step overhead
    while double-buffered in/out/pos tiles stay well under the VMEM limit."""
    sub_min = max(8, 32 // itemsize)       # f32: 8, bf16: 16, int8/fp8: 32
    if B * N * itemsize <= target_bytes:
        return B, N                        # everything fits in one block

    # Lane tile: largest 128-multiple such that `sub_min` rows fit the budget.
    tl = max(128, (target_bytes // (sub_min * itemsize)) // 128 * 128)
    if tl >= N:
        tl = N
    # Batch tile: fill the remaining budget; multiple of sub_min (or full B).
    tb = target_bytes // (tl * itemsize)
    if tb >= B or B <= sub_min:
        tb = B
    else:
        tb = min(B, max(sub_min, (tb // sub_min) * sub_min))
    return tb, tl


def _add_pos_kernel(x_ref, pos_ref, o_ref):
    # x block: (tb, tl); pos block: (1, tl) broadcasts over the batch tile.
    # Add in float32 (pos is float32, matching PyTorch promotion), then cast.
    o_ref[...] = (x_ref[...].astype(jnp.float32) + pos_ref[...]).astype(o_ref.dtype)


def position_encode_2d_forward(x: jnp.ndarray, pos_flat: jnp.ndarray) -> jnp.ndarray:
    """x: (B, C, H, W); pos_flat: (1, C*H*W) float32 prepared via prepare_pos()."""
    B, C, H, W = x.shape
    N = C * H * W
    assert pos_flat.shape == (1, N)

    out_dtype = jnp.result_type(x.dtype, pos_flat.dtype)   # PyTorch-style promotion
    itemsize = max(jnp.dtype(x.dtype).itemsize, jnp.dtype(out_dtype).itemsize)

    target_bytes, vmem_limit = _device_tuning()
    tb, tl = _choose_tiles(B, N, itemsize, target_bytes)

    # Lane-tile axis OUTER, batch-tile axis INNER: pos's block index is
    # constant along the inner axis, so Pallas skips the redundant pos re-DMA
    # and pos is read from HBM exactly once overall.
    grid = (pl.cdiv(N, tl), pl.cdiv(B, tb))

    x_flat = x.reshape(B, N)               # contiguous: free bitcast

    out_flat = pl.pallas_call(
        _add_pos_kernel,
        out_shape=jax.ShapeDtypeStruct((B, N), out_dtype),
        grid_spec=pltpu.PrefetchScalarGridSpec(
            num_scalar_prefetch=0,
            grid=grid,
            in_specs=[
                pl.BlockSpec((tb, tl), lambda l, b: (b, l)),
                pl.BlockSpec((1, tl), lambda l, b: (0, l)),
            ],
            out_specs=pl.BlockSpec((tb, tl), lambda l, b: (b, l)),
        ),
        compiler_params=pltpu.CompilerParams(
            # Outer lane-tile axis can shard across v7x's 2 TensorCores; the
            # inner batch axis stays in-order so the pos DMA elision holds.
            dimension_semantics=("parallel", "arbitrary"),
            vmem_limit_bytes=vmem_limit,
        ),
        # NOTE: no input_output_aliases -- without jit donation of x, XLA
        # inserts a defensive copy (an extra full HBM pass) to satisfy it.
        # TODO(synk): re-enable input_output_aliases={0: 0} behind a flag when
        # the caller donates x via jax.jit(..., donate_argnums=...).
    )(x_flat, pos_flat)

    return out_flat.reshape(B, C, H, W)


if __name__ == "__main__":
    # Small shapes consistent with the module: dim (=C) must be divisible by 4.
    B, C, H, W = 2, 4, 16, 16

    key = jax.random.PRNGKey(0)
    x = jax.random.normal(key, (B, C, H, W), dtype=jnp.float32)

    pos = make_position_encode_2d(dim=C, width=W, height=H)
    pos_flat = prepare_pos(pos, H, W)                     # hoisted, done once

    # Plain-JAX reference (matches the PyTorch forward).
    ref = x + pos[:, :, :H, :W]

    out = position_encode_2d_forward(x, pos_flat)
    out = jax.block_until_ready(out)

    assert out.shape == (B, C, H, W)
    assert out.dtype == ref.dtype
    assert jnp.allclose(out, ref, atol=1e-6), "mismatch vs reference"

    print("KERNEL_OK")
</pallas_src>

<mosaic_0001>
module attributes {stable_mosaic.version = 11 : i64} {
  func.func @_add_pos_kernel(%arg0: i32, %arg1: i32, %arg2: memref<2x1024xf32, #tpu.memory_space<vmem>>, %arg3: memref<1x1024xf32, #tpu.memory_space<vmem>>, %arg4: memref<2x1024xf32, #tpu.memory_space<vmem>>) attributes {dimension_semantics = [#tpu.dimension_semantics<parallel>, #tpu.dimension_semantics<arbitrary>], iteration_bounds = array<i64: 1, 1>, scalar_prefetch = 0 : i64, scratch_operands = 0 : i64, tpu.core_type = #tpu.core_type<tc>, window_params = [{transform_indices = @transform_0, window_bounds = array<i64: 2, 1024>}, {transform_indices = @transform_1, window_bounds = array<i64: 1, 1024>}, {transform_indices = @transform_2, window_bounds = array<i64: 2, 1024>}]} {
    %c0 = arith.constant 0 : index
    %c0_0 = arith.constant 0 : index
    %0 = vector.load %arg2[%c0, %c0_0] : memref<2x1024xf32, #tpu.memory_space<vmem>>, vector<2x1024xf32>
    %c0_1 = arith.constant 0 : index
    %c0_2 = arith.constant 0 : index
    %1 = vector.load %arg3[%c0_1, %c0_2] : memref<1x1024xf32, #tpu.memory_space<vmem>>, vector<1x1024xf32>
    %2 = vector.broadcast %1 : vector<1x1024xf32> to vector<2x1024xf32>
    %3 = arith.addf %0, %2 : vector<2x1024xf32>
    %c0_3 = arith.constant 0 : index
    %c0_4 = arith.constant 0 : index
    %4 = vector.load %arg4[%c0_3, %c0_4] : memref<2x1024xf32, #tpu.memory_space<vmem>>, vector<2x1024xf32>
    tpu.vector_store %arg4[%c0_3, %c0_4], %3 {strides = array<i32>} : memref<2x1024xf32, #tpu.memory_space<vmem>>, vector<2x1024xf32>,
    return
  }
  func.func @transform_0(%arg0: i32, %arg1: i32) -> (i32, i32) {
    %c0_i32 = arith.constant 0 : i32
    return %arg1, %arg0 : i32, i32
  }
  func.func @transform_1(%arg0: i32, %arg1: i32) -> (i32, i32) {
    %c0_i32 = arith.constant 0 : i32
    %c0_i32_0 = arith.constant 0 : i32
    return %c0_i32, %arg0 : i32, i32
  }
  func.func @transform_2(%arg0: i32, %arg1: i32) -> (i32, i32) {
    %c0_i32 = arith.constant 0 : i32
    return %arg1, %arg0 : i32, i32
  }
}

</mosaic_0001>

<llo_original>
// kernel: tpu_custom_call.1
$region0: #{tpu_custom_call.1}
  #allocation0 [shape = 'u32[]', space=smem, size = 0x4, offset = 0x4, fixed_abs, tag = 'smem constant byte address 0x4 - core index']
  #allocation1 [shape = 'u32[144,128]{1,0:T(1,128)}', space=vmem, size = 0x12000, scoped, tag = 'internal scratch']
  %s0 = inlined_call_operand.hbm [shape: f32[2,1024], index: 0, kind: input, shape index: {}]
  %s1 = inlined_call_operand.hbm [shape: f32[1,1024], index: 1, kind: input, shape index: {}]
  %s2 = inlined_call_operand.hbm [shape: f32[2,1024], index: 2, kind: output, shape index: {}]
  %s3 = sld [smem:[#allocation0]]
  $region26: #{tpu_custom_call.1} parent=0
    _
  %s5 = ssub.s32 1, %s3
  %s6 = scalar_select 0, %s5, %s3
  $region1: #{tpu_custom_call.1} parent=0
    #allocation2 [shape = 'u8[8192]{0}', space=vmem, size = 0x2000, scoped, tag = 'input window, operand 0, single buffered']
    #allocation3 [shape = 's32[1]{0}', space=sflag, size = 0x4, scoped, tag = 'scoped memory for tpu_custom_call.1']
    #allocation4 [shape = 's32[1]{0}', space=sflag, size = 0x4, scoped, tag = 'scoped memory for tpu_custom_call.1']
    #allocation5 [shape = 'u8[4096]{0}', space=vmem, size = 0x1000, scoped, tag = 'input window, operand 1, single buffered']
    #allocation6 [shape = 's32[1]{0}', space=sflag, size = 0x4, scoped, tag = 'scoped memory for tpu_custom_call.1']
    #allocation7 [shape = 'u8[8192]{0}', space=vmem, size = 0x2000, scoped, tag = 'output window, operand 0, single buffered']
    %7 = vsyncpa [#allocation3], 0
    %8 = vsyncpa [#allocation6], 0
    %9 = vsyncpa [#allocation4], 0
    // Predicated region
    $region2: #{tpu_custom_call.1} parent=1 // pred_check
      _
    $region3: #{tpu_custom_call.1} parent=1 // pred_check_branch
      %11 = sbr.rel (0) target = $region5
    $region4: #{tpu_custom_call.1} parent=1 // pred_region
      %s13 = ssub.s32 256, 256
      %14 = vsyncadd [#allocation3], %s13
      %s16 = sshll.u32 [#allocation2], 4
      %s17 = int_to_ptr.vmem [resolvable:$true] %s16
      %19 = dma.hbm_to_vmem [thread:$0]  %s0, 256, %s17, [#allocation3]
    $region5: #{tpu_custom_call.1} parent=1 // pred_fallthru
      _
    // Predicated region
    $region6: #{tpu_custom_call.1} parent=1 // pred_check
      _
    $region7: #{tpu_custom_call.1} parent=1 // pred_check_branch
      %21 = sbr.rel (0) target = $region9
    $region8: #{tpu_custom_call.1} parent=1 // pred_region
      %s23 = ssub.s32 128, 128
      %24 = vsyncadd [#allocation6], %s23
      %s26 = sshll.u32 [#allocation5], 4
      %s27 = int_to_ptr.vmem [resolvable:$true] %s26
      %29 = dma.hbm_to_vmem [thread:$0]  %s1, 128, %s27, [#allocation6]
    $region9: #{tpu_custom_call.1} parent=1 // pred_fallthru
      _
    // Predicated region
    $region10: #{tpu_custom_call.1} parent=1 // pred_check
      _
    $region11: #{tpu_custom_call.1} parent=1 // pred_check_branch
      %31 = sbr.rel (0) target = $region13
    $region12: #{tpu_custom_call.1} parent=1 // pred_region
      %32 = dma.done [#allocation3], 256
    $region13: #{tpu_custom_call.1} parent=1 // pred_fallthru
      _
    // Predicated region
    $region14: #{tpu_custom_call.1} parent=1 // pred_check
      _
    $region15: #{tpu_custom_call.1} parent=1 // pred_check_branch
      %34 = sbr.rel (0) target = $region17
    $region16: #{tpu_custom_call.1} parent=1 // pred_region
      %35 = dma.done [#allocation6], 128
    $region17: #{tpu_custom_call.1} parent=1 // pred_fallthru
      _
    %v36 = vld [vmem:[#allocation2] sm:$0xff]
    %v37 = vld [vmem:[#allocation2 + $0x8] sm:$0xff]
    %v38 = vld [vmem:[#allocation5] sm:$0xff]
    %v40 = vlaneseq
    %v41 = vshrl.u32 %v40, 7
    %v42 = vsub.s32 0, %v41
    %v43 = vrot.slane %v38, %v42
    %v44 = vlaneseq
    %v45 = vshrl.u32 %v44, 7
    %v46 = vsub.s32 1, %v45
    %v47 = vrot.slane %v38, %v46
    %v48 = vlaneseq
    %v49 = vshrl.u32 %v48, 7
    %v50 = vsub.s32 2, %v49
    %v51 = vrot.slane %v38, %v50
    %v52 = vlaneseq
    %v53 = vshrl.u32 %v52, 7
    %v54 = vsub.s32 3, %v53
    %v55 = vrot.slane %v38, %v54
    %v56 = vlaneseq
    %v57 = vshrl.u32 %v56, 7
    %v58 = vsub.s32 4, %v57
    %v59 = vrot.slane %v38, %v58
    %v60 = vlaneseq
    %v61 = vshrl.u32 %v60, 7
    %v62 = vsub.s32 5, %v61
    %v63 = vrot.slane %v38, %v62
    %v64 = vlaneseq
    %v65 = vshrl.u32 %v64, 7
    %v66 = vsub.s32 6, %v65
    %v67 = vrot.slane %v38, %v66
    %v68 = vlaneseq
    %v69 = vshrl.u32 %v68, 7
    %v70 = vsub.s32 7, %v69
    %v71 = vrot.slane %v38, %v70
    %v72 = vcombine.low %v43, %v47
    %v73 = vcombine.low %v51, %v55
    %v75 = vunpack.c.l.s4 1983009808
    %v76 = vunpack.c.0.s8 %v75
    %v77 = vlaneseq
    %v78 = vshrl.u32 %v77, 7
    %v79 = vsub.s32 %v76, %v78
    %v80 = vrot.slane %v72, %v79
    %v82 = vunpack.c.l.s4 1983009808
    %v83 = vunpack.c.0.s8 %v82
    %v84 = vlaneseq
    %v85 = vshrl.u32 %v84, 7
    %v86 = vsub.s32 %v83, %v85
    %v87 = vrot.slane %v73, %v86
    %v88 = vcombine.low %v80, %v87
    %v89 = vcombine.low %v59, %v63
    %v90 = vcombine.low %v67, %v71
    %v92 = vunpack.c.l.s4 1983009808
    %v93 = vunpack.c.0.s8 %v92
    %v94 = vlaneseq
    %v95 = vshrl.u32 %v94, 7
    %v96 = vsub.s32 %v93, %v95
    %v97 = vrot.slane %v89, %v96
    %v99 = vunpack.c.l.s4 1983009808
    %v100 = vunpack.c.0.s8 %v99
    %v101 = vlaneseq
    %v102 = vshrl.u32 %v101, 7
    %v103 = vsub.s32 %v100, %v102
    %v104 = vrot.slane %v90, %v103
    %v105 = vcombine.low %v97, %v104
    %v108 = vadd.f32 %v36, %v88
    %v109 = vadd.f32 %v37, %v105
    %110 = vst [vmem:[#allocation7] sm:$0xff] %v108
    %111 = vst [vmem:[#allocation7 + $0x8] sm:$0xff] %v109
    // Predicated region
    $region18: #{tpu_custom_call.1} parent=1 // pred_check
      _
    $region19: #{tpu_custom_call.1} parent=1 // pred_check_branch
      %113 = sbr.rel (0) target = $region21
    $region20: #{tpu_custom_call.1} parent=1 // pred_region
      %s115 = ssub.s32 256, 256
      %116 = vsyncadd [#allocation4], %s115
      %s118 = sshll.u32 [#allocation7], 4
      %s119 = int_to_ptr.vmem [resolvable:$true] %s118
      %121 = dma.vmem_to_hbm [thread:$0]  %s119, 256, %s2, [#allocation4]
    $region21: #{tpu_custom_call.1} parent=1 // pred_fallthru
      _
    // Predicated region
    $region22: #{tpu_custom_call.1} parent=1 // pred_check
      _
    $region23: #{tpu_custom_call.1} parent=1 // pred_check_branch
      %123 = sbr.rel (0) target = $region25
    $region24: #{tpu_custom_call.1} parent=1 // pred_region
      %124 = dma.done [#allocation4], 256
    $region25: #{tpu_custom_call.1} parent=1 // pred_fallthru
      _
    %125 = vsyncpa [#allocation3], 1
    %126 = vsyncpa [#allocation6], 1
    %127 = vsyncpa [#allocation4], 1

</llo_original>
